<compile_context>
chip_gen: v7x
topology: tpu7x:2x2x1
jax: 0.10.0
libtpu: 0.0.40
codegen_flags: <defaults>
</compile_context>

<pallas_src>
import functools

import jax
import jax.numpy as jnp
from jax import lax
from jax.experimental import pallas as pl
from jax.experimental.pallas import tpu as pltpu


def _round_up(x, m):
    return ((x + m - 1) // m) * m


def _cdiv(a, b):
    return -(-a // b)


def _vmem_limit_bytes():
    """Per-chip scoped-VMEM limit: ~3/4 of physical VMEM, capped at 96 MiB.
    v5e/v6e (128 MiB) -> 96 MiB, v7x (64 MiB per TC) -> 48 MiB."""
    cap = None
    try:
        info = pltpu.get_tpu_info()
        cap = int(getattr(info, "vmem_capacity_bytes", 0)) or None
    except Exception:
        cap = None
    if cap is None:
        cap = 64 * 1024 * 1024                  # conservative (v7x per-TC VMEM)
    try:
        kind = jax.devices()[0].device_kind.lower()
        if "v7" in kind or "7x" in kind:        # keep v7x honest even if the
            cap = min(cap, 64 * 1024 * 1024)    # query reports per-chip VMEM
    except Exception:
        pass
    return min((cap * 3) // 4, 96 * 1024 * 1024)


def _tile_vmem_bytes(tm, tk, out_p, nk, h_bytes, w_bytes, use_norm):
    """Worst-case VMEM footprint of one pipelined grid step (double-buffered)."""
    need = 2 * tm * tk * h_bytes                # h tile        (x2 buffers)
    need += 2 * tk * out_p * w_bytes            # W^T slab      (x2 buffers)
    need += 2 * tm * out_p * h_bytes            # output tile   (x2 buffers)
    if nk > 1:
        need += tm * out_p * 4                  # f32 accumulator scratch
    if use_norm:
        need += 2 * tm * 128 * 4                # (tm,1) block lane-pads to (tm,128) f32
    need += 2 * 8 * out_p * 4                   # (1,out_p) bias sublane-pads to (8,out_p)
    return need


# --------------------------------------------------------------------------- #
# Kernels
# --------------------------------------------------------------------------- #
def _kernel_resident(*refs, use_norm, use_act):
    """One (tm, out_p) output tile; W^T fully VMEM-resident (no K tiling)."""
    if use_norm:
        h_ref, norm_ref, w_ref, b_ref, o_ref = refs
    else:
        h_ref, w_ref, b_ref, o_ref = refs
        norm_ref = None

    y = jnp.dot(h_ref[...], w_ref[...], preferred_element_type=jnp.float32)
    if use_norm:
        # Per-row scale commutes with the matmul: (h*norm)@W == (h@W)*norm.
        y = y * norm_ref[...].astype(jnp.float32)
    y = y + b_ref[...].astype(jnp.float32)
    if use_act:
        y = jnp.maximum(y, 0.0)                                  # ReLU
    o_ref[...] = y.astype(o_ref.dtype)


def _kernel_ktiled(*refs, use_norm, use_act, tk, in_feats):
    """One (tm, out_p) output tile; K (in_feats) is the reduction grid axis."""
    if use_norm:
        h_ref, norm_ref, w_ref, b_ref, o_ref, acc_ref = refs
    else:
        h_ref, w_ref, b_ref, o_ref, acc_ref = refs
        norm_ref = None

    k = pl.program_id(1)

    @pl.when(k == 0)
    def _init():
        acc_ref[...] = jnp.zeros_like(acc_ref)

    h = h_ref[...]
    if in_feats % tk != 0:
        # Ragged K tail: the last h block's DMA is clipped, so the tail columns
        # hold stale VMEM (possibly NaN/Inf). Zero them so garbage never
        # reaches the accumulator; W^T is zero K-padded on the host, making
        # the tail contribute exactly 0.
        col = lax.broadcasted_iota(jnp.int32, h.shape, dimension=1)
        h = jnp.where(k * tk + col < in_feats, h, jnp.zeros_like(h))

    acc_ref[...] += jnp.dot(h, w_ref[...], preferred_element_type=jnp.float32)

    @pl.when(k == pl.num_programs(1) - 1)
    def _finalize():
        y = acc_ref[...]
        if use_norm:
            y = y * norm_ref[...].astype(jnp.float32)
        y = y + b_ref[...].astype(jnp.float32)
        if use_act:
            y = jnp.maximum(y, 0.0)
        o_ref[...] = y.astype(o_ref.dtype)


# --------------------------------------------------------------------------- #
# Host-side wrappers
# --------------------------------------------------------------------------- #
def prepare_linear_params(weight, bias, param_dtype=None):
    """Hoisted once per layer: transpose W (out,in)->(in,out), pad out_feats to
    a multiple of 128 so output stores are lane-dense, optionally cast (bf16)."""
    out_feats, in_feats = weight.shape
    out_p = _round_up(out_feats, 128)
    w_t = weight.T                                       # (in_feats, out_feats)
    b = bias
    if out_p != out_feats:
        w_t = jnp.pad(w_t, ((0, 0), (0, out_p - out_feats)))
        b = jnp.pad(b, (0, out_p - out_feats))
    if param_dtype is not None:
        w_t = w_t.astype(param_dtype)
        b = b.astype(param_dtype)
    return w_t, b.reshape(1, out_p), out_feats


def node_update(h, norm, w_t, b2, out_feats, *, test=True, activation=True,
                keep_padded_output=False,
                max_rows_per_tile=None, max_k_per_tile=None):
    """h: (N, in_feats); norm: (N, 1) or None; w_t: (in_feats, out_p); b2: (1, out_p).

    No wrapper-side padding/copies of h or norm. `max_rows_per_tile` /
    `max_k_per_tile` are testing/override knobs for the tile-size search.
    """
    N, in_feats = h.shape
    assert w_t.shape[0] == in_feats
    out_p = w_t.shape[1]
    use_norm = bool(test)
    if use_norm:
        assert norm is not None and norm.shape == (N, 1)

    h_bytes = jnp.dtype(h.dtype).itemsize
    w_bytes = jnp.dtype(w_t.dtype).itemsize

    vmem_limit = _vmem_limit_bytes()
    budget = (vmem_limit * 3) // 4              # headroom for Pallas-internal scratch

    # ---- K (in_feats) tiling only if the resident W^T slab would blow VMEM.
    if max_k_per_tile is not None:
        tk0 = min(max_k_per_tile, in_feats)
        if tk0 < in_feats:
            tk0 = max(128, _round_up(tk0, 128))          # h block lane alignment
        tk_candidates = [tk0]
    elif 2 * in_feats * out_p * w_bytes <= budget // 2:
        tk_candidates = [in_feats]                       # W^T fully resident
    else:
        # W^T is re-streamed from HBM once per row tile -> maximize tm before tk.
        tk_candidates = [512, 256]

    best = None
    for tk in tk_candidates:
        tk = min(tk, in_feats)
        nk = _cdiv(in_feats, tk)
        tm = 2048
        while tm > 8 and _tile_vmem_bytes(tm, tk, out_p, nk,
                                          h_bytes, w_bytes, use_norm) > budget:
            tm //= 2
        if best is None or tm > best[0]:
            best = (tm, tk, nk)
    tm, tk, nk = best

    if max_rows_per_tile is not None:
        tm = min(tm, max(8, _round_up(max_rows_per_tile, 8)))
    tm = min(tm, _round_up(N, 8))

    # Prefer an even number of row tiles when the grid is small, so v7x's two
    # TensorCores get balanced shards (harmless extra step on 1-TC parts).
    n_rows = _cdiv(N, tm)
    if 1 < n_rows < 8 and n_rows % 2 == 1:
        tm = max(8, _round_up(_cdiv(N, n_rows + 1), 8))
        n_rows = _cdiv(N, tm)

    # Zero K-padding of the (small) weight only; h is never padded in HBM.
    k_pad = nk * tk
    if k_pad != in_feats:
        w_t = jnp.pad(w_t, ((0, k_pad - in_feats), (0, 0)))

    inputs = [h]
    if nk == 1:
        kernel = functools.partial(_kernel_resident, use_norm=use_norm,
                                   use_act=bool(activation))
        in_specs = [pl.BlockSpec((tm, in_feats), lambda i: (i, 0))]      # h tile
        if use_norm:
            in_specs.append(pl.BlockSpec((tm, 1), lambda i: (i, 0)))     # norm tile
            inputs.append(norm)
        in_specs += [
            pl.BlockSpec((in_feats, out_p), lambda i: (0, 0)),           # resident W^T
            pl.BlockSpec((1, out_p), lambda i: (0, 0)),                  # bias
        ]
        grid = (n_rows,)
        out_spec = pl.BlockSpec((tm, out_p), lambda i: (i, 0))
        scratch_shapes = []
        dim_sem = ("parallel",)
    else:
        kernel = functools.partial(_kernel_ktiled, use_norm=use_norm,
                                   use_act=bool(activation), tk=tk,
                                   in_feats=in_feats)
        in_specs = [pl.BlockSpec((tm, tk), lambda i, k: (i, k))]         # h tile
        if use_norm:
            in_specs.append(pl.BlockSpec((tm, 1), lambda i, k: (i, 0)))  # norm tile
            inputs.append(norm)
        in_specs += [
            pl.BlockSpec((tk, out_p), lambda i, k: (k, 0)),              # W^T K-slab
            pl.BlockSpec((1, out_p), lambda i, k: (0, 0)),               # bias
        ]
        grid = (n_rows, nk)
        out_spec = pl.BlockSpec((tm, out_p), lambda i, k: (i, 0))
        scratch_shapes = [pltpu.VMEM((tm, out_p), jnp.float32)]
        dim_sem = ("parallel", "arbitrary")

    inputs += [w_t, b2]

    out = pl.pallas_call(
        kernel,
        out_shape=jax.ShapeDtypeStruct((N, out_p), h.dtype),
        grid_spec=pltpu.PrefetchScalarGridSpec(
            num_scalar_prefetch=0,
            grid=grid,
            in_specs=in_specs,
            out_specs=out_spec,
            scratch_shapes=scratch_shapes,
        ),
        compiler_params=pltpu.CompilerParams(
            dimension_semantics=dim_sem,
            vmem_limit_bytes=vmem_limit,
        ),
    )(*inputs)

    if keep_padded_output or out_p == out_feats:
        # Lane-padded activations can flow through a layer stack unchanged;
        # pad/slice once at the network boundary instead of per layer.
        return out
    return out[:, :out_feats]


def node_update_ref(h, norm, weight, bias, *, test=True, activation=True):
    x = h * norm if test else h
    y = x @ weight.T + bias
    return jnp.maximum(y, 0.0) if activation else y


if __name__ == "__main__":
    key = jax.random.PRNGKey(0)
    k_h, k_n, k_w, k_b, k_h2, k_w2, k_b2 = jax.random.split(key, 7)

    # ---- Case 1/2: resident-W path, ragged N, multiple row tiles ------------
    N, in_feats, out_feats = 130, 64, 128
    h = jax.random.normal(k_h, (N, in_feats), dtype=jnp.float32)
    norm = jax.random.uniform(k_n, (N, 1), dtype=jnp.float32,
                              minval=0.1, maxval=1.0)
    bound = 1.0 / (in_feats ** 0.5)
    weight = jax.random.uniform(k_w, (out_feats, in_feats), dtype=jnp.float32,
                                minval=-bound, maxval=bound)
    bias = jax.random.uniform(k_b, (out_feats,), dtype=jnp.float32,
                              minval=-bound, maxval=bound)
    w_t, b2, out_f = prepare_linear_params(weight, bias)        # hoisted per layer

    out = node_update(h, norm, w_t, b2, out_f, test=True, activation=True,
                      max_rows_per_tile=64)       # force multiple row tiles
    out = jax.block_until_ready(out)
    ref = node_update_ref(h, norm, weight, bias, test=True, activation=True)
    assert out.shape == ref.shape
    assert jnp.allclose(out, ref, atol=1e-4, rtol=1e-4), "mismatch (test=True)"

    out2 = node_update(h, None, w_t, b2, out_f, test=False, activation=True)
    out2 = jax.block_until_ready(out2)
    ref2 = node_update_ref(h, norm, weight, bias, test=False, activation=True)
    assert jnp.allclose(out2, ref2, atol=1e-4, rtol=1e-4), "mismatch (test=False)"

    # ---- Case 3: K-tiled path (ragged K tail masked in-kernel), out_feats not
    # a multiple of 128 (column slice), no activation --------------------------
    N3, in3, out3 = 100, 160, 96
    h3 = jax.random.normal(k_h2, (N3, in3), dtype=jnp.float32)
    norm3 = jax.random.uniform(k_n, (N3, 1), dtype=jnp.float32,
                               minval=0.1, maxval=1.0)
    bound3 = 1.0 / (in3 ** 0.5)
    w3 = jax.random.uniform(k_w2, (out3, in3), dtype=jnp.float32,
                            minval=-bound3, maxval=bound3)
    b3 = jax.random.uniform(k_b2, (out3,), dtype=jnp.float32,
                            minval=-bound3, maxval=bound3)
    w3_t, b3_2, out3_f = prepare_linear_params(w3, b3)
    out3_k = node_update(h3, norm3, w3_t, b3_2, out3_f, test=True,
                         activation=False,
                         max_k_per_tile=128)      # force nk=2 + ragged K tail
    out3_k = jax.block_until_ready(out3_k)
    ref3 = node_update_ref(h3, norm3, w3, b3, test=True, activation=False)
    assert out3_k.shape == ref3.shape
    assert jnp.allclose(out3_k, ref3, atol=1e-4, rtol=1e-4), "mismatch (K-tiled)"

    # ---- Case 4: bf16 operands, f32 accumulation -----------------------------
    w_t_bf, b2_bf, _ = prepare_linear_params(weight, bias,
                                             param_dtype=jnp.bfloat16)
    out_bf = node_update(h.astype(jnp.bfloat16), norm, w_t_bf, b2_bf, out_f,
                         test=True, activation=True)
    out_bf = jax.block_until_ready(out_bf)
    assert jnp.allclose(out_bf.astype(jnp.float32), ref,
                        atol=5e-2, rtol=5e-2), "mismatch (bf16)"

    print("KERNEL_OK")
</pallas_src>

<mosaic_0001>
module attributes {stable_mosaic.version = 11 : i64} {
  func.func @_kernel_resident(%arg0: i32, %arg1: memref<40x64xf32, #tpu.memory_space<vmem>>, %arg2: memref<40x1xf32, #tpu.memory_space<vmem>>, %arg3: memref<64x128xf32, #tpu.memory_space<vmem>>, %arg4: memref<1x128xf32, #tpu.memory_space<vmem>>, %arg5: memref<40x128xf32, #tpu.memory_space<vmem>>) attributes {dimension_semantics = [#tpu.dimension_semantics<parallel>], iteration_bounds = array<i64: 4>, scalar_prefetch = 0 : i64, scratch_operands = 0 : i64, tpu.core_type = #tpu.core_type<tc>, window_params = [{transform_indices = @transform_0, window_bounds = array<i64: 40, 64>}, {transform_indices = @transform_1, window_bounds = array<i64: 40, 1>}, {pipeline_mode = #tpu.pipeline_mode<synchronous>, transform_indices = @transform_2, window_bounds = array<i64: 64, 128>}, {pipeline_mode = #tpu.pipeline_mode<synchronous>, transform_indices = @transform_3, window_bounds = array<i64: 1, 128>}, {transform_indices = @transform_4, window_bounds = array<i64: 40, 128>}]} {
    %c0 = arith.constant 0 : index
    %c0_0 = arith.constant 0 : index
    %0 = vector.load %arg1[%c0, %c0_0] : memref<40x64xf32, #tpu.memory_space<vmem>>, vector<40x64xf32>
    %c0_1 = arith.constant 0 : index
    %c0_2 = arith.constant 0 : index
    %1 = vector.load %arg3[%c0_1, %c0_2] : memref<64x128xf32, #tpu.memory_space<vmem>>, vector<64x128xf32>
    %cst = arith.constant dense<0.000000e+00> : vector<40x128xf32>
    %2 = tpu.matmul %0, %1, %cst {dimension_numbers = #tpu.dot_dimension_numbers<[1], [0], [0], [1], [0, 0, 1, 1], [], []>} : vector<40x64xf32>, vector<64x128xf32>, vector<40x128xf32> -> vector<40x128xf32>
    %c0_3 = arith.constant 0 : index
    %c0_4 = arith.constant 0 : index
    %3 = vector.load %arg2[%c0_3, %c0_4] : memref<40x1xf32, #tpu.memory_space<vmem>>, vector<40x1xf32>
    %4 = vector.broadcast %3 : vector<40x1xf32> to vector<40x128xf32>
    %5 = arith.mulf %2, %4 : vector<40x128xf32>
    %c0_5 = arith.constant 0 : index
    %c0_6 = arith.constant 0 : index
    %6 = vector.load %arg4[%c0_5, %c0_6] : memref<1x128xf32, #tpu.memory_space<vmem>>, vector<1x128xf32>
    %7 = vector.broadcast %6 : vector<1x128xf32> to vector<40x128xf32>
    %8 = arith.addf %5, %7 : vector<40x128xf32>
    %cst_7 = arith.constant 0.000000e+00 : f32
    %9 = vector.broadcast %cst_7 : f32 to vector<40x128xf32>
    %10 = arith.maximumf %8, %9 : vector<40x128xf32>
    %c0_8 = arith.constant 0 : index
    %c0_9 = arith.constant 0 : index
    %11 = vector.load %arg5[%c0_8, %c0_9] : memref<40x128xf32, #tpu.memory_space<vmem>>, vector<40x128xf32>
    tpu.vector_store %arg5[%c0_8, %c0_9], %10 {strides = array<i32>} : memref<40x128xf32, #tpu.memory_space<vmem>>, vector<40x128xf32>,
    return
  }
  func.func @transform_0(%arg0: i32) -> (i32, i32) {
    %c0_i32 = arith.constant 0 : i32
    %c0_i32_0 = arith.constant 0 : i32
    return %arg0, %c0_i32 : i32, i32
  }
  func.func @transform_1(%arg0: i32) -> (i32, i32) {
    %c0_i32 = arith.constant 0 : i32
    %c0_i32_0 = arith.constant 0 : i32
    return %arg0, %c0_i32 : i32, i32
  }
  func.func @transform_2(%arg0: i32) -> (i32, i32) {
    %c0_i32 = arith.constant 0 : i32
    %c0_i32_0 = arith.constant 0 : i32
    %c0_i32_1 = arith.constant 0 : i32
    return %c0_i32, %c0_i32_0 : i32, i32
  }
  func.func @transform_3(%arg0: i32) -> (i32, i32) {
    %c0_i32 = arith.constant 0 : i32
    %c0_i32_0 = arith.constant 0 : i32
    %c0_i32_1 = arith.constant 0 : i32
    return %c0_i32, %c0_i32_0 : i32, i32
  }
  func.func @transform_4(%arg0: i32) -> (i32, i32) {
    %c0_i32 = arith.constant 0 : i32
    %c0_i32_0 = arith.constant 0 : i32
    return %arg0, %c0_i32 : i32, i32
  }
}

</mosaic_0001>

<llo_original>
// kernel: tpu_custom_call.1
$region0: #{tpu_custom_call.1}
  #allocation0 [shape = 'u32[]', space=smem, size = 0x4, offset = 0x4, fixed_abs, tag = 'smem constant byte address 0x4 - core index']
  #allocation1 [shape = 'u32[144,128]{1,0:T(1,128)}', space=vmem, size = 0x12000, scoped, tag = 'internal scratch']
  %s0 = inlined_call_operand.vmem [shape: f32[130,64], index: 0, kind: input, shape index: {}]
  %s1 = inlined_call_operand.vmem [shape: f32[130,1], index: 1, kind: input, shape index: {}]
  %s2 = inlined_call_operand.vmem [shape: f32[64,128], index: 2, kind: input, shape index: {}]
  %s3 = inlined_call_operand.vmem [shape: f32[1,128], index: 3, kind: input, shape index: {}]
  %s4 = inlined_call_operand.hbm [shape: f32[130,128], index: 4, kind: output, shape index: {}]
  %s5 = sld [smem:[#allocation0]]
  $region49: #{tpu_custom_call.1} parent=0
    _
  %s7 = ssub.s32 1, %s5
  %s8 = scalar_select 0, %s7, %s5
  $region1: #{tpu_custom_call.1} parent=0
    #allocation2 [shape = 'u8[40960]{0}', space=vmem, size = 0xa000, scoped, tag = 'output window, operand 0']
    #allocation3 [shape = 's32[2]{0}', space=sflag, size = 0x8, scoped, tag = 'scoped memory for tpu_custom_call.1']
    %9 = vsyncpa [#allocation3], 0
    %s10 = scalar_lea.sflag [#allocation3], 1
    %11 = vsyncpa %s10, 0
    loop: start=0, step=1, limit=6
    $region2: #{tpu_custom_call.1} parent=1 // loop_pre_header
      _
    $region3: #{tpu_custom_call.1} parent=1 // loop_header
      %s13 = sphi 0, %s17
      %p14 = scmp.ge.s32.totalorder %s13, 6
      %s23 = sphi 0, %s25
      %s26 = sphi 0, %s23
      %s27 = sphi 0, %s26
      %s43 = sphi 0, %s27
      %s49 = sphi 0, %s51
      %s52 = sphi 0, %s49
      %s53 = sphi 0, %s52
      %s69 = sphi 0, %s53
      %s73 = sphi 0, %s73
      %s75 = sphi 0, %s73
      %s76 = sphi 0, %s75
      %s90 = sphi 0, %s76
      %s94 = sphi 0, %s94
      %s96 = sphi 0, %s94
      %s97 = sphi 0, %s96
      %s111 = sphi 0, %s97
      %s117 = sphi 0, %s119
      %s120 = sphi 0, %s117
      %s121 = sphi 0, %s120
      %s137 = sphi 0, %s121
    $region4: #{tpu_custom_call.1} parent=1 // loop_header_branch
      %16 = sbr.rel (%p14) target = $region8
    $region5: #{tpu_custom_call.1} parent=1 // loop_body
      %s18 = ssub.s32 %s13, 1
      %s19 = ssub.s32 %s13, 2
      %s20 = sadd.s32 %s13, 1
      %s21 = ssub.s32 %s13, %s20
      %p22 = scmp.eq.s32.totalorder %s21, 0
      %s24 = sadd.s32 %s23, 1
      %s25 = scalar_select %p22, %s23, %s24
      %p28 = pneg %p22
      %p29 = scmp.eq.s32.totalorder %s13, 3
      %p30 = por %p28, %p29
      %p31 = scmp.ne.s32.totalorder %s23, %s26
      %p32 = scmp.eq.s32.totalorder %s13, 0
      %p33 = por %p31, %p32
      %p34 = scmp.ne.s32.totalorder %s23, %s26
      %p35 = scmp.eq.s32.totalorder %s18, 3
      %p36 = por %p34, %p35
      %p37 = scmp.ne.s32.totalorder %s26, %s27
      %p38 = scmp.eq.s32.totalorder %s18, 0
      %p39 = por %p37, %p38
      %p40 = scmp.ne.s32.totalorder %s26, %s27
      %p41 = scmp.eq.s32.totalorder %s19, 3
      %p42 = por %p40, %p41
      %p44 = scmp.ne.s32.totalorder %s27, %s43
      %p45 = scmp.eq.s32.totalorder %s19, 0
      %p46 = por %p44, %p45
      %s47 = ssub.s32 %s13, %s20
      %p48 = scmp.eq.s32.totalorder %s47, 0
      %s50 = sadd.s32 %s49, 1
      %s51 = scalar_select %p48, %s49, %s50
      %p54 = pneg %p48
      %p55 = scmp.eq.s32.totalorder %s13, 3
      %p56 = por %p54, %p55
      %p57 = scmp.ne.s32.totalorder %s49, %s52
      %p58 = scmp.eq.s32.totalorder %s13, 0
      %p59 = por %p57, %p58
      %p60 = scmp.ne.s32.totalorder %s49, %s52
      %p61 = scmp.eq.s32.totalorder %s18, 3
      %p62 = por %p60, %p61
      %p63 = scmp.ne.s32.totalorder %s52, %s53
      %p64 = scmp.eq.s32.totalorder %s18, 0
      %p65 = por %p63, %p64
      %p66 = scmp.ne.s32.totalorder %s52, %s53
      %p67 = scmp.eq.s32.totalorder %s19, 3
      %p68 = por %p66, %p67
      %p70 = scmp.ne.s32.totalorder %s53, %s69
      %p71 = scmp.eq.s32.totalorder %s19, 0
      %p72 = por %p70, %p71
      %s74 = sadd.s32 %s73, 1
      %p77 = scmp.eq.s32.totalorder %s13, 3
      %p78 = scmp.ne.s32.totalorder %s73, %s75
      %p79 = scmp.eq.s32.totalorder %s13, 0
      %p80 = por %p78, %p79
      %p81 = scmp.ne.s32.totalorder %s73, %s75
      %p82 = scmp.eq.s32.totalorder %s18, 3
      %p83 = por %p81, %p82
      %p84 = scmp.ne.s32.totalorder %s75, %s76
      %p85 = scmp.eq.s32.totalorder %s18, 0
      %p86 = por %p84, %p85
      %p87 = scmp.ne.s32.totalorder %s75, %s76
      %p88 = scmp.eq.s32.totalorder %s19, 3
      %p89 = por %p87, %p88
      %p91 = scmp.ne.s32.totalorder %s76, %s90
      %p92 = scmp.eq.s32.totalorder %s19, 0
      %p93 = por %p91, %p92
      %s95 = sadd.s32 %s94, 1
      %p98 = scmp.eq.s32.totalorder %s13, 3
      %p99 = scmp.ne.s32.totalorder %s94, %s96
      %p100 = scmp.eq.s32.totalorder %s13, 0
      %p101 = por %p99, %p100
      %p102 = scmp.ne.s32.totalorder %s94, %s96
      %p103 = scmp.eq.s32.totalorder %s18, 3
      %p104 = por %p102, %p103
      %p105 = scmp.ne.s32.totalorder %s96, %s97
      %p106 = scmp.eq.s32.totalorder %s18, 0
      %p107 = por %p105, %p106
      %p108 = scmp.ne.s32.totalorder %s96, %s97
      %p109 = scmp.eq.s32.totalorder %s19, 3
      %p110 = por %p108, %p109
      %p112 = scmp.ne.s32.totalorder %s97, %s111
      %p113 = scmp.eq.s32.totalorder %s19, 0
      %p114 = por %p112, %p113
      %s115 = ssub.s32 %s13, %s20
      %p116 = scmp.eq.s32.totalorder %s115, 0
      %s118 = sadd.s32 %s117, 1
      %s119 = scalar_select %p116, %s117, %s118
      %p122 = pneg %p116
      %p123 = scmp.eq.s32.totalorder %s13, 3
      %p124 = por %p122, %p123
      %p125 = scmp.ne.s32.totalorder %s117, %s120
      %p126 = scmp.eq.s32.totalorder %s13, 0
      %p127 = por %p125, %p126
      %p128 = scmp.ne.s32.totalorder %s117, %s120
      %p129 = scmp.eq.s32.totalorder %s18, 3
      %p130 = por %p128, %p129
      %p131 = scmp.ne.s32.totalorder %s120, %s121
      %p132 = scmp.eq.s32.totalorder %s18, 0
      %p133 = por %p131, %p132
      %p134 = scmp.ne.s32.totalorder %s120, %s121
      %p135 = scmp.eq.s32.totalorder %s19, 3
      %p136 = por %p134, %p135
      %p138 = scmp.ne.s32.totalorder %s121, %s137
      %p139 = scmp.eq.s32.totalorder %s19, 0
      %p140 = por %p138, %p139
      %p141 = scmp.le.s32.totalorder 1, %s13
      %p142 = scmp.lt.s32.totalorder %s13, 5
      %p143 = pnand %p141, %p142
      %p144 = pneg %p143
      // Predicated region
      $region9: #{tpu_custom_call.1} parent=5 // pred_check
        _
      $region10: #{tpu_custom_call.1} parent=5 // pred_check_branch
        %146 = sbr.rel (%p143) target = $region12
      $region11: #{tpu_custom_call.1} parent=5 // pred_region
        %s147 = ssub.s32 %s13, 1
        // Predicated region
        $region13: #{tpu_custom_call.1} parent=11 // pred_check
          %p148 = pneg %p86
        $region14: #{tpu_custom_call.1} parent=11 // pred_check_branch
          %150 = sbr.rel (%p148) target = $region16
        $region15: #{tpu_custom_call.1} parent=11 // pred_region
          _
        $region16: #{tpu_custom_call.1} parent=11 // pred_fallthru
          _
        // Predicated region
        $region17: #{tpu_custom_call.1} parent=11 // pred_check
          %p151 = pneg %p107
        $region18: #{tpu_custom_call.1} parent=11 // pred_check_branch
          %153 = sbr.rel (%p151) target = $region20
        $region19: #{tpu_custom_call.1} parent=11 // pred_region
          _
        $region20: #{tpu_custom_call.1} parent=11 // pred_fallthru
          _
      $region12: #{tpu_custom_call.1} parent=5 // pred_fallthru
        _
      %p154 = scmp.lt.s32.totalorder %s13, 4
      // Predicated region
      $region21: #{tpu_custom_call.1} parent=5 // pred_check
        %p155 = pneg %p154
      $region22: #{tpu_custom_call.1} parent=5 // pred_check_branch
        %157 = sbr.rel (%p155) target = $region24
      $region23: #{tpu_custom_call.1} parent=5 // pred_region
        // Predicated region
        $region25: #{tpu_custom_call.1} parent=23 // pred_check
          %p158 = pneg %p33
        $region26: #{tpu_custom_call.1} parent=23 // pred_check_branch
          %160 = sbr.rel (%p158) target = $region28
        $region27: #{tpu_custom_call.1} parent=23 // pred_region
          %s161 = smul.u32 5, %s13
          %s162 = ssub.s32 17, %s161
          %p163 = scmp.lt.s32.totalorder %s162, 5
          %s164 = scalar_select %p163, %s162, 5
          %s165 = smul.u32 128, %s164
          %p166 = scmp.lt.s32.totalorder %s161, 16
          %s167 = scalar_select %p166, %s161, 16
          %s168 = smul.addr %s167, 8
          %s169 = scalar_lea.vmem %s0, %s168
          %s170 = smul.u32 5, %s13
          %s171 = ssub.s32 17, %s170
          %p172 = scmp.lt.s32.totalorder %s171, 5
          %s173 = scalar_select %p172, %s171, 5
          %s174 = smul.u32 128, %s173
        $region28: #{tpu_custom_call.1} parent=23 // pred_fallthru
          _
        // Predicated region
        $region29: #{tpu_custom_call.1} parent=23 // pred_check
          %p175 = pneg %p59
        $region30: #{tpu_custom_call.1} parent=23 // pred_check_branch
          %177 = sbr.rel (%p175) target = $region32
        $region31: #{tpu_custom_call.1} parent=23 // pred_region
          %s178 = smul.u32 5, %s13
          %s179 = ssub.s32 17, %s178
          %p180 = scmp.lt.s32.totalorder %s179, 5
          %s181 = scalar_select %p180, %s179, 5
          %s182 = smul.u32 128, %s181
          %p183 = scmp.lt.s32.totalorder %s178, 16
          %s184 = scalar_select %p183, %s178, 16
          %s185 = smul.addr %s184, 8
          %s186 = scalar_lea.vmem %s1, %s185
          %s187 = smul.u32 5, %s13
          %s188 = ssub.s32 17, %s187
          %p189 = scmp.lt.s32.totalorder %s188, 5
          %s190 = scalar_select %p189, %s188, 5
          %s191 = smul.u32 128, %s190
        $region32: #{tpu_custom_call.1} parent=23 // pred_fallthru
          _
      $region24: #{tpu_custom_call.1} parent=5 // pred_fallthru
        _
      %p192 = scmp.le.s32.totalorder 1, %s13
      %p193 = scmp.lt.s32.totalorder %s13, 5
      %p194 = pnand %p192, %p193
      %p195 = pneg %p194
      // Predicated region
      $region33: #{tpu_custom_call.1} parent=5 // pred_check
        _
      $region34: #{tpu_custom_call.1} parent=5 // pred_check_branch
        %197 = sbr.rel (%p194) target = $region36
      $region35: #{tpu_custom_call.1} parent=5 // pred_region
        %s198 = ssub.s32 %s13, 1
        %s199 = smul.u32 5, %s18
        %s200 = ssub.s32 17, %s199
        %p201 = scmp.lt.s32.totalorder %s200, 5
        %s202 = scalar_select %p201, %s200, 5
        %s203 = smul.u32 128, %s202
        %p204 = scmp.lt.s32.totalorder %s199, 16
        %s205 = scalar_select %p204, %s199, 16
        %s206 = smul.addr %s205, 8
        %s207 = scalar_lea.vmem %s0, %s206
        %p208 = pneg %p39
        %p209 = pneg %p36
        %s210 = smul.u32 5, %s18
        %s211 = ssub.s32 17, %s210
        %p212 = scmp.lt.s32.totalorder %s211, 5
        %s213 = scalar_select %p212, %s211, 5
        %s214 = smul.u32 128, %s213
        %p215 = scmp.lt.s32.totalorder %s210, 16
        %s216 = scalar_select %p215, %s210, 16
        %s217 = smul.addr %s216, 8
        %s218 = scalar_lea.vmem %s1, %s217
        %p219 = pneg %p65
        %p220 = pneg %p62
        %p221 = pneg %p86
        %p222 = pneg %p83
        %p223 = pneg %p107
        %p224 = pneg %p104
        %p225 = pneg %p133
        %p226 = pneg %p130
        %s227 = sand.u32 %s120, 1
        %s228 = scalar_lea.sflag [#allocation3], %s227
        %s229 = sand.u32 %s120, 1
        %s230 = smul.addr %s229, 40
        %s231 = scalar_lea.vmem [#allocation2], %s230
        %s232 = smul.u32 5, %s18
        %s233 = ssub.s32 17, %s232
        %p234 = scmp.lt.s32.totalorder %s233, 5
        %s235 = scalar_select %p234, %s233, 5
        %s236 = smul.u32 128, %s235
        %p237 = scmp.lt.s32.totalorder %s232, 16
        %s238 = scalar_select %p237, %s232, 16
        %s239 = smul.addr %s238, 8
        %s240 = scalar_lea.vmem %s0, %s239
        %s241 = smul.u32 5, %s18
        %s242 = ssub.s32 17, %s241
        %p243 = scmp.lt.s32.totalorder %s242, 5
        %s244 = scalar_select %p243, %s242, 5
        %s245 = smul.u32 128, %s244
        %s246 = smul.u32 5, %s18
        %s247 = ssub.s32 17, %s246
        %p248 = scmp.lt.s32.totalorder %s247, 5
        %s249 = scalar_select %p248, %s247, 5
        %s250 = smul.u32 128, %s249
        %p251 = scmp.lt.s32.totalorder %s246, 16
        %s252 = scalar_select %p251, %s246, 16
        %s253 = smul.addr %s252, 8
        %s254 = scalar_lea.vmem %s1, %s253
        %s255 = smul.u32 5, %s18
        %s256 = ssub.s32 17, %s255
        %p257 = scmp.lt.s32.totalorder %s256, 5
        %s258 = scalar_select %p257, %s256, 5
        %s259 = smul.u32 128, %s258
        %s260 = smul.u32 5, %s18
        %s261 = ssub.s32 17, %s260
        %p262 = scmp.lt.s32.totalorder %s261, 5
        %s263 = scalar_select %p262, %s261, 5
        %s264 = smul.u32 128, %s263
        %v265 = vld [vmem:[%s240] sm:$0xff]
        %v266 = vld [vmem:[%s240 + $0x8] sm:$0xff]
        %v267 = vld [vmem:[%s240 + $0x10] sm:$0xff]
        %v268 = vld [vmem:[%s240 + $0x18] sm:$0xff]
        %v269 = vld [vmem:[%s240 + $0x20] sm:$0xff]
        %v270 = vld [vmem:[%s2] sm:$0xff]
        %v271 = vld [vmem:[%s2 + $0x8] sm:$0xff]
        %v272 = vld [vmem:[%s2 + $0x10] sm:$0xff]
        %v273 = vld [vmem:[%s2 + $0x18] sm:$0xff]
        %v274 = vld [vmem:[%s2 + $0x20] sm:$0xff]
        %v275 = vld [vmem:[%s2 + $0x28] sm:$0xff]
        %v276 = vld [vmem:[%s2 + $0x30] sm:$0xff]
        %v277 = vld [vmem:[%s2 + $0x38] sm:$0xff]
        %vm278 = vcmask 523264
        %v280 = vsel %vm278, %v265, 0
        %v283 = vsel %vm278, %v266, 0
        %v286 = vsel %vm278, %v267, 0
        %v289 = vsel %vm278, %v268, 0
        %v292 = vsel %vm278, %v269, 0
        %294 = vmatprep.subr.mxu0 0.0
        %295 = vmatpush1.msra.mxu0 %v270
        %296 = vmatprep.subr.mxu0 0.0
        %297 = vmatpush1.msra.mxu0 %v271
        %298 = vmatprep.subr.mxu0 0.0
        %299 = vmatpush1.msra.mxu0 %v272
        %300 = vmatprep.subr.mxu0 0.0
        %301 = vmatpush1.msra.mxu0 %v273
        %302 = vmatprep.subr.mxu0 0.0
        %303 = vmatpush1.msra.mxu0 %v274
        %304 = vmatprep.subr.mxu0 0.0
        %305 = vmatpush1.msra.mxu0 %v275
        %306 = vmatprep.subr.mxu0 0.0
        %307 = vmatpush1.msra.mxu0 %v276
        %308 = vmatprep.subr.mxu0 0.0
        %309 = vmatpush1.msra.mxu0 %v277
        %310 = vmatprep.subr.mxu0 0.0
        %311 = vmatpush1.msra.mxu0 0.0
        %312 = vmatprep.subr.mxu0 0.0
        %313 = vmatpush1.msra.mxu0 0.0
        %314 = vmatprep.subr.mxu0 0.0
        %315 = vmatpush1.msra.mxu0 0.0
        %316 = vmatprep.subr.mxu0 0.0
        %317 = vmatpush1.msra.mxu0 0.0
        %318 = vmatprep.subr.mxu0 0.0
        %319 = vmatpush1.msra.mxu0 0.0
        %320 = vmatprep.subr.mxu0 0.0
        %321 = vmatpush1.msra.mxu0 0.0
        %322 = vmatprep.subr.mxu0 0.0
        %323 = vmatpush1.msra.mxu0 0.0
        %324 = vmatprep.subr.mxu0 0.0
        %325 = vmatpush1.msra.mxu0 0.0
        %326 = vmatprep.subr.mxu0 0.0
        %327 = vmatpush1.msra.mxu0 0.0
        %328 = vmatprep.subr.mxu0 0.0
        %329 = vmatpush1.msra.mxu0 0.0
        %330 = vmatprep.subr.mxu0 0.0
        %331 = vmatpush1.msra.mxu0 0.0
        %332 = vmatprep.subr.mxu0 0.0
        %333 = vmatpush1.msra.mxu0 0.0
        %334 = vmatprep.subr.mxu0 0.0
        %335 = vmatpush1.msra.mxu0 0.0
        %336 = vmatprep.subr.mxu0 0.0
        %337 = vmatpush1.msra.mxu0 0.0
        %338 = vmatprep.subr.mxu0 0.0
        %339 = vmatpush1.msra.mxu0 0.0
        %340 = vmatprep.subr.mxu0 0.0
        %341 = vmatpush1.msra.mxu0 0.0
        %342 = vmatprep.subr.mxu0 0.0
        %343 = vmatpush1.msra.mxu0 0.0
        %344 = vmatprep.subr.mxu0 0.0
        %345 = vmatpush1.msra.mxu0 0.0
        %346 = vmatprep.subr.mxu0 0.0
        %347 = vmatpush1.msra.mxu0 0.0
        %348 = vmatprep.subr.mxu0 0.0
        %349 = vmatpush1.msra.mxu0 0.0
        %350 = vmatprep.subr.mxu0 0.0
        %351 = vmatpush1.msra.mxu0 0.0
        %352 = vmatprep.subr.mxu0 0.0
        %353 = vmatpush1.msra.mxu0 0.0
        %354 = vmatprep.subr.mxu0 0.0
        %355 = vmatpush1.msra.mxu0 0.0
        %356 = vmatprep.subr.mxu0 0.0
        %357 = vmatpush1.msra.mxu0 0.0
        %358 = vmatprep.mubr.f32.mxu0 0.0
        %359 = vmatmul.mubr.f32.gmra.mrb[0].mxu0 %v280
        %v360 = vpop.f32.mrb[0].mxu0
        %v361 = vadd.f32 0.0, %v360
        %v362 = vpop.f32.mrb[0].mxu0
        %363 = vmatprep.mubr.f32.mxu0 0.0
        %364 = vmatmul.mubr.f32.gmra.mrb[0].mxu0 %v283
        %v365 = vpop.f32.mrb[0].mxu0
        %v366 = vadd.f32 0.0, %v365
        %v367 = vpop.f32.mrb[0].mxu0
        %368 = vmatprep.mubr.f32.mxu0 0.0
        %369 = vmatmul.mubr.f32.gmra.mrb[0].mxu0 %v286
        %v370 = vpop.f32.mrb[0].mxu0
        %v371 = vadd.f32 0.0, %v370
        %v372 = vpop.f32.mrb[0].mxu0
        %373 = vmatprep.mubr.f32.mxu0 0.0
        %374 = vmatmul.mubr.f32.gmra.mrb[0].mxu0 %v289
        %v375 = vpop.f32.mrb[0].mxu0
        %v376 = vadd.f32 0.0, %v375
        %v377 = vpop.f32.mrb[0].mxu0
        %378 = vmatprep.mubr.f32.mxu0 0.0
        %379 = vmatmul.mubr.f32.gmra.mrb[0].mxu0 %v292
        %v380 = vpop.f32.mrb[0].mxu0
        %v381 = vadd.f32 0.0, %v380
        %v382 = vpop.f32.mrb[0].mxu0
        %383 = vdwg.mxu0
        %v384 = vld [vmem:[%s254] sm:$0xff]
        %v385 = vld [vmem:[%s254 + $0x8] sm:$0xff]
        %v386 = vld [vmem:[%s254 + $0x10] sm:$0xff]
        %v387 = vld [vmem:[%s254 + $0x18] sm:$0xff]
        %v388 = vld [vmem:[%s254 + $0x20] sm:$0xff]
        %390 = vset.pattern.permute.xlu0 0
        %391 = vperm.xlu0 %390, %v384
        %v392 = vpop.permute.xlu0 %391
        %395 = vset.pattern.permute.xlu0 0
        %396 = vperm.xlu0 %395, %v385
        %v397 = vpop.permute.xlu0 %396
        %400 = vset.pattern.permute.xlu0 0
        %401 = vperm.xlu0 %400, %v386
        %v402 = vpop.permute.xlu0 %401
        %405 = vset.pattern.permute.xlu0 0
        %406 = vperm.xlu0 %405, %v387
        %v407 = vpop.permute.xlu0 %406
        %410 = vset.pattern.permute.xlu0 0
        %411 = vperm.xlu0 %410, %v388
        %v412 = vpop.permute.xlu0 %411
        %v414 = vmul.f32 %v361, %v392
        %v415 = vmul.f32 %v366, %v397
        %v416 = vmul.f32 %v371, %v402
        %v417 = vmul.f32 %v376, %v407
        %v418 = vmul.f32 %v381, %v412
        %v419 = vld [vmem:[%s3] sm:$0x1]
        %v421 = vlaneseq
        %v422 = vshrl.u32 %v421, 7
        %v423 = vsub.s32 0, %v422
        %v424 = vrot.slane %v419, %v423
        %v426 = vadd.f32 %v414, %v424
        %v427 = vadd.f32 %v415, %v424
        %v428 = vadd.f32 %v416, %v424
        %v429 = vadd.f32 %v417, %v424
        %v430 = vadd.f32 %v418, %v424
        %v431 = vmax.f32 %v426, 0.0
        %v432 = vmax.f32 %v427, 0.0
        %v433 = vmax.f32 %v428, 0.0
        %v434 = vmax.f32 %v429, 0.0
        %v435 = vmax.f32 %v430, 0.0
        %436 = vst [vmem:[%s231] sm:$0xff] %v431
        %437 = vst [vmem:[%s231 + $0x8] sm:$0xff] %v432
        %438 = vst [vmem:[%s231 + $0x10] sm:$0xff] %v433
        %439 = vst [vmem:[%s231 + $0x18] sm:$0xff] %v434
        %440 = vst [vmem:[%s231 + $0x20] sm:$0xff] %v435
        %s441 = sand.u32 %s120, 1
        %s442 = scalar_lea.sflag [#allocation3], %s441
        %s443 = sand.u32 %s120, 1
        %s444 = smul.addr %s443, 40
        %s445 = scalar_lea.vmem [#allocation2], %s444
        // Predicated region
        $region37: #{tpu_custom_call.1} parent=35 // pred_check
          %p446 = pneg %p130
        $region38: #{tpu_custom_call.1} parent=35 // pred_check_branch
          %448 = sbr.rel (%p446) target = $region40
        $region39: #{tpu_custom_call.1} parent=35 // pred_region
          %s449 = smul.u32 5, %s18
          %s450 = ssub.s32 17, %s449
          %p451 = scmp.lt.s32.totalorder %s450, 5
          %s452 = scalar_select %p451, %s450, 5
          %s453 = smul.u32 128, %s452
          %s455 = ssub.s32 640, %s453
          %456 = vsyncadd %s442, %s455
          %p457 = scmp.ne.s32.totalorder 0, %s453
          %s458 = smul.addr %s449, 128
          %s459 = scalar_lea.hbm %s4, %s458
          %s460 = smul.u32 8, %s452
          %s461 = sshll.u32 %s445, 4
          %s462 = int_to_ptr.vmem [resolvable:$true] %s461
          %s463 = sshll.u32 %s460, 4
          %467 = dma.vmem_to_hbm [thread:$0]  (%p457), %s462, %s463, %s459, %s442, 128, 128, 8
        $region40: #{tpu_custom_call.1} parent=35 // pred_fallthru
          _
      $region36: #{tpu_custom_call.1} parent=5 // pred_fallthru
        _
      %p468 = scmp.le.s32.totalorder 2, %s13
      // Predicated region
      $region41: #{tpu_custom_call.1} parent=5 // pred_check
        %p469 = pneg %p468
      $region42: #{tpu_custom_call.1} parent=5 // pred_check_branch
        %471 = sbr.rel (%p469) target = $region44
      $region43: #{tpu_custom_call.1} parent=5 // pred_region
        %s472 = ssub.s32 %s13, 2
        // Predicated region
        $region45: #{tpu_custom_call.1} parent=43 // pred_check
          %p473 = pneg %p136
        $region46: #{tpu_custom_call.1} parent=43 // pred_check_branch
          %475 = sbr.rel (%p473) target = $region48
        $region47: #{tpu_custom_call.1} parent=43 // pred_region
          %s476 = sand.u32 %s121, 1
          %s477 = scalar_lea.sflag [#allocation3], %s476
          %s478 = sand.u32 %s121, 1
          %s479 = smul.addr %s478, 40
          %s480 = scalar_lea.vmem [#allocation2], %s479
          %481 = dma.done %s477, 640
        $region48: #{tpu_custom_call.1} parent=43 // pred_fallthru
          _
      $region44: #{tpu_custom_call.1} parent=5 // pred_fallthru
        _
    $region6: #{tpu_custom_call.1} parent=1 // loop_footer
      %s17 = sadd.s32 1, %s13
    $region7: #{tpu_custom_call.1} parent=1 // loop_footer_branch
      %12 = sbr.rel target = $region3
    $region8: #{tpu_custom_call.1} parent=1 // loop_exit
      _
    %482 = vsyncpa [#allocation3], 1
    %s483 = scalar_lea.sflag [#allocation3], 1
    %484 = vsyncpa %s483, 1

</llo_original>
